<compile_context>
chip_gen: v6e
topology: v6e:2x2x1
jax: 0.10.0
libtpu: 0.0.40
codegen_flags: <defaults>
</compile_context>

<pallas_src>
import math
import jax
import jax.numpy as jnp
from jax.experimental import pallas as pl
from jax.experimental.pallas import tpu as pltpu

# temporal-table sizes for freq='h': month, day, weekday, hour
_TEMPORAL_SIZES = (13, 32, 7, 24)
_TR_PAD = 128  # combined temporal table padded to a full lane tile


def _sinusoidal_table(n, d_model):
    """Same construction as PositionalEmbedding / FixedEmbedding tables."""
    pos = jnp.arange(n, dtype=jnp.float32)[:, None]
    div = jnp.exp(jnp.arange(0, d_model, 2, dtype=jnp.float32)
                  * -(math.log(10000.0) / d_model))
    tab = jnp.zeros((n, d_model), dtype=jnp.float32)
    tab = tab.at[:, 0::2].set(jnp.sin(pos * div))
    tab = tab.at[:, 1::2].set(jnp.cos(pos * div))
    return tab


def data_embedding_kernel(x3_ref, mark_ref, w_ref, posb_ref, tab_ref, o_ref):
    """One (seq-tile, batch) block.

    x3_ref   : (TL, 3C)   compute dtype  -- [x[t-1] | x[t] | x[t+1]] channels
    mark_ref : (TL, 4)    int32          -- temporal indices, pre-offset
    w_ref    : (3C, Dp)   compute dtype  -- fused 3-tap circular-conv weight
    posb_ref : (TL, Dp)   compute dtype  -- positional embedding (+ conv bias)
    tab_ref  : (128, Dp)  compute dtype  -- concatenated temporal tables (0-pad)
    o_ref    : (TL, Dp)   out dtype
    """
    tl = o_ref.shape[0]
    tr = tab_ref.shape[0]

    # circular Conv1d(kernel=3) == one fused matmul on the MXU (f32 accumulate)
    acc = jnp.dot(x3_ref[...], w_ref[...], preferred_element_type=jnp.float32)

    # temporal embedding: the 4 (offset) index ranges are disjoint, so the sum
    # of 4 one-hots == a single OR of 4 compares; the gather runs as a
    # lane-dense (TL,128)@(128,Dp) matmul on the otherwise-idle MXU.
    # (out-of-range marks hit a zero pad row and contribute nothing)
    rows = jax.lax.broadcasted_iota(jnp.int32, (tl, tr), 1)
    m = mark_ref[...]
    hit = ((m[:, 0:1] == rows) | (m[:, 1:2] == rows)
           | (m[:, 2:3] == rows) | (m[:, 3:4] == rows))
    acc = acc + jnp.dot(hit.astype(tab_ref.dtype), tab_ref[...],
                        preferred_element_type=jnp.float32)

    # positional embedding (+ optional conv bias); streamed once per seq tile
    # (block index constant across the inner batch axis -> DMA elided).
    acc = acc + posb_ref[...].astype(jnp.float32)

    o_ref[...] = acc.astype(o_ref.dtype)


def prepare_params(params, seq_len, *, compute_dtype=jnp.bfloat16):
    """One-time parameter preparation (hoisted off the per-call critical path)."""
    w = params["w"]                              # Conv1d weight [D, C, 3]
    D, C, _ = w.shape
    C3 = 3 * C
    Dp = max(128, ((D + 127) // 128) * 128)      # lane-dense d_model

    if seq_len > params["pe"].shape[0]:
        raise ValueError("seq_len exceeds the positional table (max_len)")

    # fused circular-conv weight: [D, C, 3] -> [3C, D]
    w_cat = jnp.concatenate([w[:, :, 0].T, w[:, :, 1].T, w[:, :, 2].T], axis=0)

    # positional table (+ optional conv bias) folded into one [L, D] slab
    posb = params["pe"][:seq_len]
    if "b" in params:            # official Autoformer TokenEmbedding: bias=False
        posb = posb + params["b"][None, :]

    # combined temporal table, zero-padded to 128 rows (lane-dense MXU K)
    tab = jnp.concatenate([params["month_emb"], params["day_emb"],
                           params["weekday_emb"], params["hour_emb"]], axis=0)
    tab = jnp.pad(tab, ((0, _TR_PAD - tab.shape[0]), (0, 0)))

    if Dp != D:
        w_cat = jnp.pad(w_cat, ((0, 0), (0, Dp - D)))
        posb = jnp.pad(posb, ((0, 0), (0, Dp - D)))
        tab = jnp.pad(tab, ((0, 0), (0, Dp - D)))

    offs = jnp.cumsum(jnp.array((0,) + _TEMPORAL_SIZES[:-1], dtype=jnp.int32))

    return {
        "w_cat": w_cat.astype(compute_dtype),
        "posb": posb.astype(compute_dtype),
        "tab": tab.astype(compute_dtype),
        "offs": offs,
        "D": D, "Dp": Dp, "C3": C3, "L": seq_len,
        "compute_dtype": compute_dtype,
    }


def _pick_row_tile(seq_len, d_pad, out_itemsize, max_rows=4096):
    """Largest row tile that divides L, is sublane friendly, and keeps each
    double-buffered output-stream buffer around ~2 MiB (amortizes the ~0.35 us
    per-grid-step overhead while fitting v7x's 64 MiB VMEM)."""
    target = min(max_rows, max(8, (2 << 20) // max(d_pad * out_itemsize, 1)))
    if seq_len <= target:
        return seq_len                 # full seq dim is always legal
    t = (target // 8) * 8
    while t >= 8:
        if seq_len % t == 0:
            return t
        t -= 8
    return seq_len                     # fallback: one full-length tile


def data_embedding(x, x_mark, prep, *, out_dtype=None,
                   max_rows_per_tile=4096, return_padded=False):
    B, L, C = x.shape
    assert L == prep["L"], "prepare_params was built for a different seq_len"
    D, Dp, C3 = prep["D"], prep["Dp"], prep["C3"]
    compute_dtype = prep["compute_dtype"]
    if out_dtype is None:
        out_dtype = compute_dtype

    # shifted-concat input [B, L, 3C]: row t sees x[t-1], x[t], x[t+1] (circular)
    # TODO(synk): for wide C, form the 3 taps in-kernel from a haloed tile
    # instead of materializing x3 in HBM (negligible for small C).
    x3 = jnp.concatenate([jnp.roll(x, 1, axis=1), x, jnp.roll(x, -1, axis=1)],
                         axis=-1).astype(compute_dtype)
    marks = x_mark.astype(jnp.int32) + prep["offs"][None, None, :]

    out_isz = jnp.dtype(out_dtype).itemsize
    xb = jnp.dtype(compute_dtype).itemsize
    TL = _pick_row_tile(L, Dp, out_isz, max_rows_per_tile)
    # seq tiles leading (megacore / parallel axis on v7x), batch inner so the
    # positional block stays resident across the batch loop.
    grid = (L // TL, B)

    # per-step VMEM estimate: double-buffered streams + resident tables + temps
    est = (2 * (TL * C3 * xb + TL * 4 * 4 + TL * Dp * xb + TL * Dp * out_isz)
           + 2 * (C3 * Dp * xb + _TR_PAD * Dp * xb)
           + 2 * TL * Dp * 4 + TL * _TR_PAD * 4)
    vmem_limit = int(min(max(2 * est, 16 << 20), 40 << 20))

    out = pl.pallas_call(
        data_embedding_kernel,
        out_shape=jax.ShapeDtypeStruct((B, L, Dp), out_dtype),
        grid=grid,
        in_specs=[
            pl.BlockSpec((None, TL, C3), lambda j, b: (b, j, 0)),   # x (3 taps)
            pl.BlockSpec((None, TL, 4), lambda j, b: (b, j, 0)),    # time marks
            pl.BlockSpec((C3, Dp), lambda j, b: (0, 0)),            # conv weight
            pl.BlockSpec((TL, Dp), lambda j, b: (j, 0)),            # pos (+bias), reused over b
            pl.BlockSpec((_TR_PAD, Dp), lambda j, b: (0, 0)),       # temporal tables
        ],
        out_specs=pl.BlockSpec((None, TL, Dp), lambda j, b: (b, j, 0)),
        compiler_params=pltpu.CompilerParams(
            dimension_semantics=("parallel", "parallel"),
            vmem_limit_bytes=vmem_limit),
    )(x3, marks, prep["w_cat"], prep["posb"], prep["tab"])

    # TODO(synk): nn.Dropout(p=0.1) is eval-mode identity here (no stochastic
    # dropout in the deterministic forward).
    if return_padded or Dp == D:
        return out
    # TODO(synk): prefer d_model % 128 == 0 (or consume the padded layout
    # downstream) to avoid this extra full read+write of the output.
    return out[:, :, :D]


def init_params(key, c_in, d_model, max_len=5000):
    # TokenEmbedding: Conv1d(c_in, d_model, 3, padding=1, padding_mode='circular',
    # bias=False), kaiming_normal_(mode='fan_in', nonlinearity='leaky_relu').
    gain = math.sqrt(2.0 / (1.0 + 0.01 ** 2))
    std = gain / math.sqrt(c_in * 3)
    w = std * jax.random.normal(key, (d_model, c_in, 3), dtype=jnp.float32)
    month, day, weekday, hour = (_sinusoidal_table(n, d_model)
                                 for n in _TEMPORAL_SIZES)
    return {
        "w": w,
        "pe": _sinusoidal_table(max_len, d_model),   # PositionalEmbedding
        "month_emb": month, "day_emb": day,          # FixedEmbedding tables
        "weekday_emb": weekday, "hour_emb": hour,
    }


def data_embedding_reference(x, x_mark, params):
    """Pure-JAX reference mirroring the PyTorch forward (eval mode)."""
    w = params["w"]
    hi = jax.lax.Precision.HIGHEST
    conv = (jnp.einsum("blc,dc->bld", jnp.roll(x, 1, axis=1), w[:, :, 0], precision=hi)
            + jnp.einsum("blc,dc->bld", x, w[:, :, 1], precision=hi)
            + jnp.einsum("blc,dc->bld", jnp.roll(x, -1, axis=1), w[:, :, 2], precision=hi))
    if "b" in params:
        conv = conv + params["b"]
    L = x.shape[1]
    pos = params["pe"][:L][None]
    xm = x_mark.astype(jnp.int32)
    temp = (params["month_emb"][xm[..., 0]] + params["day_emb"][xm[..., 1]]
            + params["weekday_emb"][xm[..., 2]] + params["hour_emb"][xm[..., 3]])
    return conv + pos + temp


if __name__ == "__main__":
    B, L, C, D = 2, 8, 4, 32
    key = jax.random.PRNGKey(0)
    k_x, k_m, k_p = jax.random.split(key, 3)

    x = jax.random.normal(k_x, (B, L, C), dtype=jnp.float32)
    # x_mark columns: [month, day, weekday, hour]  (freq='h')
    km1, km2, km3, km4 = jax.random.split(k_m, 4)
    x_mark = jnp.stack([
        jax.random.randint(km1, (B, L), 0, 13),
        jax.random.randint(km2, (B, L), 0, 32),
        jax.random.randint(km3, (B, L), 0, 7),
        jax.random.randint(km4, (B, L), 0, 24),
    ], axis=-1)

    params = init_params(k_p, C, D)
    ref = data_embedding_reference(x, x_mark, params)

    # f32-compute + f32-output path: tight numerical check vs pure-JAX reference.
    prep_f32 = prepare_params(params, L, compute_dtype=jnp.float32)
    out_f32 = jax.block_until_ready(
        data_embedding(x, x_mark, prep_f32, out_dtype=jnp.float32))
    assert out_f32.shape == (B, L, D) and out_f32.dtype == jnp.float32
    assert jnp.allclose(out_f32, ref, atol=1e-3, rtol=1e-3), \
        float(jnp.max(jnp.abs(out_f32 - ref)))

    # Default bandwidth-optimized path: bf16 streams (x3/weight/posb/tab) and
    # bf16 output; f32 MXU accumulation in-kernel. Looser numerical check.
    prep_bf16 = prepare_params(params, L)                 # compute_dtype=bf16
    out_bf16 = jax.block_until_ready(data_embedding(x, x_mark, prep_bf16))
    assert out_bf16.shape == (B, L, D) and out_bf16.dtype == jnp.bfloat16
    err = out_bf16.astype(jnp.float32) - ref
    assert jnp.allclose(out_bf16.astype(jnp.float32), ref,
                        atol=1.5e-1, rtol=5e-2), float(jnp.max(jnp.abs(err)))

    print("KERNEL_OK")
</pallas_src>

<mosaic_0001>
module attributes {stable_mosaic.version = 11 : i64} {
  func.func @data_embedding_kernel(%arg0: i32, %arg1: i32, %arg2: memref<1x8x12xf32, #tpu.memory_space<vmem>>, %arg3: memref<1x8x4xi32, #tpu.memory_space<vmem>>, %arg4: memref<12x128xf32, #tpu.memory_space<vmem>>, %arg5: memref<8x128xf32, #tpu.memory_space<vmem>>, %arg6: memref<128x128xf32, #tpu.memory_space<vmem>>, %arg7: memref<1x8x128xf32, #tpu.memory_space<vmem>>) attributes {dimension_semantics = [#tpu.dimension_semantics<parallel>, #tpu.dimension_semantics<parallel>], iteration_bounds = array<i64: 1, 2>, scalar_prefetch = 0 : i64, scratch_operands = 0 : i64, tpu.core_type = #tpu.core_type<tc>, window_params = [{transform_indices = @transform_0, window_bounds = array<i64: 1, 8, 12>}, {transform_indices = @transform_1, window_bounds = array<i64: 1, 8, 4>}, {pipeline_mode = #tpu.pipeline_mode<synchronous>, transform_indices = @transform_2, window_bounds = array<i64: 12, 128>}, {transform_indices = @transform_3, window_bounds = array<i64: 8, 128>}, {pipeline_mode = #tpu.pipeline_mode<synchronous>, transform_indices = @transform_4, window_bounds = array<i64: 128, 128>}, {transform_indices = @transform_5, window_bounds = array<i64: 1, 8, 128>}]} {
    %c0 = arith.constant 0 : index
    %c0_0 = arith.constant 0 : index
    %c0_1 = arith.constant 0 : index
    %0 = vector.load %arg2[%c0, %c0_0, %c0_1] : memref<1x8x12xf32, #tpu.memory_space<vmem>>, vector<1x8x12xf32>
    %1 = vector.shape_cast %0 : vector<1x8x12xf32> to vector<8x12xf32>
    %c0_2 = arith.constant 0 : index
    %c0_3 = arith.constant 0 : index
    %2 = vector.load %arg4[%c0_2, %c0_3] : memref<12x128xf32, #tpu.memory_space<vmem>>, vector<12x128xf32>
    %cst = arith.constant dense<0.000000e+00> : vector<8x128xf32>
    %3 = tpu.matmul %1, %2, %cst {dimension_numbers = #tpu.dot_dimension_numbers<[1], [0], [0], [1], [0, 0, 1, 1], [], []>} : vector<8x12xf32>, vector<12x128xf32>, vector<8x128xf32> -> vector<8x128xf32>
    %4 = tpu.iota {dimensions = array<i32: 1>} : vector<8x128xi32>
    %c0_4 = arith.constant 0 : index
    %c0_5 = arith.constant 0 : index
    %c0_6 = arith.constant 0 : index
    %5 = vector.load %arg3[%c0_4, %c0_5, %c0_6] : memref<1x8x4xi32, #tpu.memory_space<vmem>>, vector<1x8x4xi32>
    %6 = vector.shape_cast %5 : vector<1x8x4xi32> to vector<8x4xi32>
    %7 = vector.extract_strided_slice %6 {offsets = [0, 0], sizes = [8, 1], strides = [1, 1]} : vector<8x4xi32> to vector<8x1xi32>
    %8 = vector.broadcast %7 : vector<8x1xi32> to vector<8x128xi32>
    %9 = arith.cmpi eq, %8, %4 : vector<8x128xi32>
    %10 = vector.extract_strided_slice %6 {offsets = [0, 1], sizes = [8, 1], strides = [1, 1]} : vector<8x4xi32> to vector<8x1xi32>
    %11 = vector.broadcast %10 : vector<8x1xi32> to vector<8x128xi32>
    %12 = arith.cmpi eq, %11, %4 : vector<8x128xi32>
    %13 = arith.ori %9, %12 : vector<8x128xi1>
    %14 = vector.extract_strided_slice %6 {offsets = [0, 2], sizes = [8, 1], strides = [1, 1]} : vector<8x4xi32> to vector<8x1xi32>
    %15 = vector.broadcast %14 : vector<8x1xi32> to vector<8x128xi32>
    %16 = arith.cmpi eq, %15, %4 : vector<8x128xi32>
    %17 = arith.ori %13, %16 : vector<8x128xi1>
    %18 = vector.extract_strided_slice %6 {offsets = [0, 3], sizes = [8, 1], strides = [1, 1]} : vector<8x4xi32> to vector<8x1xi32>
    %19 = vector.broadcast %18 : vector<8x1xi32> to vector<8x128xi32>
    %20 = arith.cmpi eq, %19, %4 : vector<8x128xi32>
    %21 = arith.ori %17, %20 : vector<8x128xi1>
    %22 = arith.extui %21 : vector<8x128xi1> to vector<8x128xi32>
    %23 = arith.sitofp %22 : vector<8x128xi32> to vector<8x128xf32>
    %c0_7 = arith.constant 0 : index
    %c0_8 = arith.constant 0 : index
    %24 = vector.load %arg6[%c0_7, %c0_8] : memref<128x128xf32, #tpu.memory_space<vmem>>, vector<128x128xf32>
    %cst_9 = arith.constant dense<0.000000e+00> : vector<8x128xf32>
    %25 = tpu.matmul %23, %24, %cst_9 {dimension_numbers = #tpu.dot_dimension_numbers<[1], [0], [0], [1], [0, 0, 1, 1], [], []>} : vector<8x128xf32>, vector<128x128xf32>, vector<8x128xf32> -> vector<8x128xf32>
    %26 = arith.addf %3, %25 : vector<8x128xf32>
    %c0_10 = arith.constant 0 : index
    %c0_11 = arith.constant 0 : index
    %27 = vector.load %arg5[%c0_10, %c0_11] : memref<8x128xf32, #tpu.memory_space<vmem>>, vector<8x128xf32>
    %28 = arith.addf %26, %27 : vector<8x128xf32>
    %c0_12 = arith.constant 0 : index
    %c0_13 = arith.constant 0 : index
    %c0_14 = arith.constant 0 : index
    %29 = vector.load %arg7[%c0_12, %c0_13, %c0_14] : memref<1x8x128xf32, #tpu.memory_space<vmem>>, vector<1x8x128xf32>
    %30 = vector.shape_cast %29 : vector<1x8x128xf32> to vector<8x128xf32>
    %31 = vector.shape_cast %28 : vector<8x128xf32> to vector<1x8x128xf32>
    tpu.vector_store %arg7[%c0_12, %c0_13, %c0_14], %31 {strides = array<i32>} : memref<1x8x128xf32, #tpu.memory_space<vmem>>, vector<1x8x128xf32>,
    return
  }
  func.func @transform_0(%arg0: i32, %arg1: i32) -> (i32, i32, i32) {
    %c0_i32 = arith.constant 0 : i32
    %c0_i32_0 = arith.constant 0 : i32
    return %arg1, %arg0, %c0_i32 : i32, i32, i32
  }
  func.func @transform_1(%arg0: i32, %arg1: i32) -> (i32, i32, i32) {
    %c0_i32 = arith.constant 0 : i32
    %c0_i32_0 = arith.constant 0 : i32
    return %arg1, %arg0, %c0_i32 : i32, i32, i32
  }
  func.func @transform_2(%arg0: i32, %arg1: i32) -> (i32, i32) {
    %c0_i32 = arith.constant 0 : i32
    %c0_i32_0 = arith.constant 0 : i32
    %c0_i32_1 = arith.constant 0 : i32
    return %c0_i32, %c0_i32_0 : i32, i32
  }
  func.func @transform_3(%arg0: i32, %arg1: i32) -> (i32, i32) {
    %c0_i32 = arith.constant 0 : i32
    %c0_i32_0 = arith.constant 0 : i32
    return %arg0, %c0_i32 : i32, i32
  }
  func.func @transform_4(%arg0: i32, %arg1: i32) -> (i32, i32) {
    %c0_i32 = arith.constant 0 : i32
    %c0_i32_0 = arith.constant 0 : i32
    %c0_i32_1 = arith.constant 0 : i32
    return %c0_i32, %c0_i32_0 : i32, i32
  }
  func.func @transform_5(%arg0: i32, %arg1: i32) -> (i32, i32, i32) {
    %c0_i32 = arith.constant 0 : i32
    %c0_i32_0 = arith.constant 0 : i32
    return %arg1, %arg0, %c0_i32 : i32, i32, i32
  }
}

</mosaic_0001>

<llo_original>
// kernel: tpu_custom_call.1
$region0: #{tpu_custom_call.1}
  #allocation0 [shape = 'u32[]', space=smem, size = 0x4, offset = 0x4, fixed_abs, tag = 'smem constant byte address 0x4 - core index']
  #allocation1 [shape = 'u32[144,128]{1,0:T(1,128)}', space=vmem, size = 0x12000, scoped, tag = 'internal scratch']
  %s0 = inlined_call_operand.vmem [shape: f32[2,8,12], index: 0, kind: input, shape index: {}]
  %s1 = inlined_call_operand.vmem [shape: s32[2,8,4], index: 1, kind: input, shape index: {}]
  %s2 = inlined_call_operand.hbm [shape: f32[12,128], index: 2, kind: input, shape index: {}]
  %s3 = inlined_call_operand.vmem [shape: f32[8,128], index: 3, kind: input, shape index: {}]
  %s4 = inlined_call_operand.hbm [shape: f32[128,128], index: 4, kind: input, shape index: {}]
  %s5 = inlined_call_operand.hbm [shape: f32[2,8,128], index: 5, kind: output, shape index: {}]
  %s6 = sld [smem:[#allocation0]]
  $region61: #{tpu_custom_call.1} parent=0
    _
  %s8 = ssub.s32 1, %s6
  %s9 = scalar_select 0, %s8, %s6
  $region1: #{tpu_custom_call.1} parent=0
    #allocation2 [shape = 'u8[8192]{0}', space=vmem, size = 0x2000, scoped, tag = 'input window, operand 2, single buffered']
    #allocation3 [shape = 's32[2]{0}', space=sflag, size = 0x8, scoped, tag = 'scoped memory for tpu_custom_call.1']
    #allocation4 [shape = 's32[2]{0}', space=sflag, size = 0x8, scoped, tag = 'scoped memory for tpu_custom_call.1']
    #allocation5 [shape = 'u8[65536]{0}', space=vmem, size = 0x10000, scoped, tag = 'input window, operand 4, single buffered']
    #allocation6 [shape = 's32[1]{0}', space=sflag, size = 0x4, scoped, tag = 'scoped memory for tpu_custom_call.1']
    #allocation7 [shape = 'u8[8192]{0}', space=vmem, size = 0x2000, scoped, tag = 'output window, operand 0']
    %10 = vsyncpa [#allocation3], 0
    %11 = vsyncpa [#allocation6], 0
    %12 = vsyncpa [#allocation4], 0
    %s13 = scalar_lea.sflag [#allocation4], 1
    %14 = vsyncpa %s13, 0
    loop: start=0, step=1, limit=4
    $region2: #{tpu_custom_call.1} parent=1 // loop_pre_header
      _
    $region3: #{tpu_custom_call.1} parent=1 // loop_header
      %s16 = sphi 0, %s20
      %p17 = scmp.ge.s32.totalorder %s16, 4
      %s23 = sphi 0, %s35
      %s24 = sphi 0, %s31
      %s25 = sphi 0, %s23
      %s26 = sphi 0, %s24
      %s27 = sphi 0, %s25
      %s28 = sphi 0, %s26
      %s40 = sphi 0, %s42
      %s43 = sphi 0, %s40
      %s44 = sphi 0, %s43
      %s60 = sphi 0, %s44
      %s68 = sphi 0, %s70
      %s71 = sphi 0, %s68
      %s72 = sphi 0, %s71
      %s88 = sphi 0, %s72
      %s92 = sphi 0, %s92
      %s94 = sphi 0, %s92
      %s95 = sphi 0, %s94
      %s109 = sphi 0, %s95
      %s115 = sphi 0, %s117
      %s118 = sphi 0, %s115
      %s119 = sphi 0, %s118
      %s135 = sphi 0, %s119
      %s139 = sphi 0, %s139
      %s141 = sphi 0, %s139
      %s142 = sphi 0, %s141
      %s156 = sphi 0, %s142
      %s164 = sphi 0, %s166
      %s167 = sphi 0, %s164
      %s168 = sphi 0, %s167
      %s184 = sphi 0, %s168
    $region4: #{tpu_custom_call.1} parent=1 // loop_header_branch
      %19 = sbr.rel (%p17) target = $region8
    $region5: #{tpu_custom_call.1} parent=1 // loop_body
      %s21 = ssub.s32 %s16, 1
      %s22 = ssub.s32 %s16, 2
      %s29 = sadd.s32 1, %s24
      %p30 = scmp.ge.s32.totalorder %s29, 2
      %s31 = scalar_select %p30, 0, %s29
      %s32 = sadd.s32 1, %s23
      %s33 = scalar_select %p30, %s32, %s23
      %p34 = scmp.ge.s32.totalorder %s33, 1
      %s35 = scalar_select %p34, 0, %s33
      %s36 = ssub.s32 %s24, %s31
      %s37 = ssub.s32 %s23, %s35
      %s38 = sor.u32 %s36, %s37
      %p39 = scmp.eq.s32.totalorder %s38, 0
      %s41 = sadd.s32 %s40, 1
      %s42 = scalar_select %p39, %s40, %s41
      %p45 = pneg %p39
      %p46 = scmp.eq.s32.totalorder %s16, 1
      %p47 = por %p45, %p46
      %p48 = scmp.ne.s32.totalorder %s40, %s43
      %p49 = scmp.eq.s32.totalorder %s16, 0
      %p50 = por %p48, %p49
      %p51 = scmp.ne.s32.totalorder %s40, %s43
      %p52 = scmp.eq.s32.totalorder %s21, 1
      %p53 = por %p51, %p52
      %p54 = scmp.ne.s32.totalorder %s43, %s44
      %p55 = scmp.eq.s32.totalorder %s21, 0
      %p56 = por %p54, %p55
      %p57 = scmp.ne.s32.totalorder %s43, %s44
      %p58 = scmp.eq.s32.totalorder %s22, 1
      %p59 = por %p57, %p58
      %p61 = scmp.ne.s32.totalorder %s44, %s60
      %p62 = scmp.eq.s32.totalorder %s22, 0
      %p63 = por %p61, %p62
      %s64 = ssub.s32 %s24, %s31
      %s65 = ssub.s32 %s23, %s35
      %s66 = sor.u32 %s64, %s65
      %p67 = scmp.eq.s32.totalorder %s66, 0
      %s69 = sadd.s32 %s68, 1
      %s70 = scalar_select %p67, %s68, %s69
      %p73 = pneg %p67
      %p74 = scmp.eq.s32.totalorder %s16, 1
      %p75 = por %p73, %p74
      %p76 = scmp.ne.s32.totalorder %s68, %s71
      %p77 = scmp.eq.s32.totalorder %s16, 0
      %p78 = por %p76, %p77
      %p79 = scmp.ne.s32.totalorder %s68, %s71
      %p80 = scmp.eq.s32.totalorder %s21, 1
      %p81 = por %p79, %p80
      %p82 = scmp.ne.s32.totalorder %s71, %s72
      %p83 = scmp.eq.s32.totalorder %s21, 0
      %p84 = por %p82, %p83
      %p85 = scmp.ne.s32.totalorder %s71, %s72
      %p86 = scmp.eq.s32.totalorder %s22, 1
      %p87 = por %p85, %p86
      %p89 = scmp.ne.s32.totalorder %s72, %s88
      %p90 = scmp.eq.s32.totalorder %s22, 0
      %p91 = por %p89, %p90
      %s93 = sadd.s32 %s92, 1
      %p96 = scmp.eq.s32.totalorder %s16, 1
      %p97 = scmp.ne.s32.totalorder %s92, %s94
      %p98 = scmp.eq.s32.totalorder %s16, 0
      %p99 = por %p97, %p98
      %p100 = scmp.ne.s32.totalorder %s92, %s94
      %p101 = scmp.eq.s32.totalorder %s21, 1
      %p102 = por %p100, %p101
      %p103 = scmp.ne.s32.totalorder %s94, %s95
      %p104 = scmp.eq.s32.totalorder %s21, 0
      %p105 = por %p103, %p104
      %p106 = scmp.ne.s32.totalorder %s94, %s95
      %p107 = scmp.eq.s32.totalorder %s22, 1
      %p108 = por %p106, %p107
      %p110 = scmp.ne.s32.totalorder %s95, %s109
      %p111 = scmp.eq.s32.totalorder %s22, 0
      %p112 = por %p110, %p111
      %s113 = ssub.s32 %s23, %s35
      %p114 = scmp.eq.s32.totalorder %s113, 0
      %s116 = sadd.s32 %s115, 1
      %s117 = scalar_select %p114, %s115, %s116
      %p120 = pneg %p114
      %p121 = scmp.eq.s32.totalorder %s16, 1
      %p122 = por %p120, %p121
      %p123 = scmp.ne.s32.totalorder %s115, %s118
      %p124 = scmp.eq.s32.totalorder %s16, 0
      %p125 = por %p123, %p124
      %p126 = scmp.ne.s32.totalorder %s115, %s118
      %p127 = scmp.eq.s32.totalorder %s21, 1
      %p128 = por %p126, %p127
      %p129 = scmp.ne.s32.totalorder %s118, %s119
      %p130 = scmp.eq.s32.totalorder %s21, 0
      %p131 = por %p129, %p130
      %p132 = scmp.ne.s32.totalorder %s118, %s119
      %p133 = scmp.eq.s32.totalorder %s22, 1
      %p134 = por %p132, %p133
      %p136 = scmp.ne.s32.totalorder %s119, %s135
      %p137 = scmp.eq.s32.totalorder %s22, 0
      %p138 = por %p136, %p137
      %s140 = sadd.s32 %s139, 1
      %p143 = scmp.eq.s32.totalorder %s16, 1
      %p144 = scmp.ne.s32.totalorder %s139, %s141
      %p145 = scmp.eq.s32.totalorder %s16, 0
      %p146 = por %p144, %p145
      %p147 = scmp.ne.s32.totalorder %s139, %s141
      %p148 = scmp.eq.s32.totalorder %s21, 1
      %p149 = por %p147, %p148
      %p150 = scmp.ne.s32.totalorder %s141, %s142
      %p151 = scmp.eq.s32.totalorder %s21, 0
      %p152 = por %p150, %p151
      %p153 = scmp.ne.s32.totalorder %s141, %s142
      %p154 = scmp.eq.s32.totalorder %s22, 1
      %p155 = por %p153, %p154
      %p157 = scmp.ne.s32.totalorder %s142, %s156
      %p158 = scmp.eq.s32.totalorder %s22, 0
      %p159 = por %p157, %p158
      %s160 = ssub.s32 %s24, %s31
      %s161 = ssub.s32 %s23, %s35
      %s162 = sor.u32 %s160, %s161
      %p163 = scmp.eq.s32.totalorder %s162, 0
      %s165 = sadd.s32 %s164, 1
      %s166 = scalar_select %p163, %s164, %s165
      %p169 = pneg %p163
      %p170 = scmp.eq.s32.totalorder %s16, 1
      %p171 = por %p169, %p170
      %p172 = scmp.ne.s32.totalorder %s164, %s167
      %p173 = scmp.eq.s32.totalorder %s16, 0
      %p174 = por %p172, %p173
      %p175 = scmp.ne.s32.totalorder %s164, %s167
      %p176 = scmp.eq.s32.totalorder %s21, 1
      %p177 = por %p175, %p176
      %p178 = scmp.ne.s32.totalorder %s167, %s168
      %p179 = scmp.eq.s32.totalorder %s21, 0
      %p180 = por %p178, %p179
      %p181 = scmp.ne.s32.totalorder %s167, %s168
      %p182 = scmp.eq.s32.totalorder %s22, 1
      %p183 = por %p181, %p182
      %p185 = scmp.ne.s32.totalorder %s168, %s184
      %p186 = scmp.eq.s32.totalorder %s22, 0
      %p187 = por %p185, %p186
      %p188 = scmp.le.s32.totalorder 1, %s16
      %p189 = scmp.lt.s32.totalorder %s16, 3
      %p190 = pnand %p188, %p189
      %p191 = pneg %p190
      // Predicated region
      $region9: #{tpu_custom_call.1} parent=5 // pred_check
        _
      $region10: #{tpu_custom_call.1} parent=5 // pred_check_branch
        %193 = sbr.rel (%p190) target = $region12
      $region11: #{tpu_custom_call.1} parent=5 // pred_region
        %s194 = ssub.s32 %s16, 1
        // Predicated region
        $region13: #{tpu_custom_call.1} parent=11 // pred_check
          %p195 = pneg %p105
        $region14: #{tpu_custom_call.1} parent=11 // pred_check_branch
          %197 = sbr.rel (%p195) target = $region16
        $region15: #{tpu_custom_call.1} parent=11 // pred_region
          %s199 = ssub.s32 256, 256
          %200 = vsyncadd [#allocation3], %s199
          %s201 = sshll.u32 [#allocation2], 4
          %s202 = int_to_ptr.vmem [resolvable:$true] %s201
          %207 = dma.hbm_to_vmem [thread:$0]  %s2, 256, %s202, [#allocation3], 128, 128, 8
        $region16: #{tpu_custom_call.1} parent=11 // pred_fallthru
          _
        // Predicated region
        $region17: #{tpu_custom_call.1} parent=11 // pred_check
          %p208 = pneg %p131
        $region18: #{tpu_custom_call.1} parent=11 // pred_check_branch
          %210 = sbr.rel (%p208) target = $region20
        $region19: #{tpu_custom_call.1} parent=11 // pred_region
          %p211 = scmp.lt.s32.totalorder %s25, 0
          %s212 = scalar_select %p211, %s25, 0
          %s213 = smul.addr %s212, 8
          %s214 = scalar_lea.vmem %s3, %s213
        $region20: #{tpu_custom_call.1} parent=11 // pred_fallthru
          _
        // Predicated region
        $region21: #{tpu_custom_call.1} parent=11 // pred_check
          %p215 = pneg %p152
        $region22: #{tpu_custom_call.1} parent=11 // pred_check_branch
          %217 = sbr.rel (%p215) target = $region24
        $region23: #{tpu_custom_call.1} parent=11 // pred_region
          %s219 = ssub.s32 2048, 2048
          %220 = vsyncadd [#allocation6], %s219
          %s221 = sshll.u32 [#allocation5], 4
          %s222 = int_to_ptr.vmem [resolvable:$true] %s221
          %227 = dma.hbm_to_vmem [thread:$0]  %s4, 2048, %s222, [#allocation6], 128, 128, 8
        $region24: #{tpu_custom_call.1} parent=11 // pred_fallthru
          _
      $region12: #{tpu_custom_call.1} parent=5 // pred_fallthru
        _
      %p228 = scmp.lt.s32.totalorder %s16, 2
      // Predicated region
      $region25: #{tpu_custom_call.1} parent=5 // pred_check
        %p229 = pneg %p228
      $region26: #{tpu_custom_call.1} parent=5 // pred_check_branch
        %231 = sbr.rel (%p229) target = $region28
      $region27: #{tpu_custom_call.1} parent=5 // pred_region
        // Predicated region
        $region29: #{tpu_custom_call.1} parent=27 // pred_check
          %p232 = pneg %p50
        $region30: #{tpu_custom_call.1} parent=27 // pred_check_branch
          %234 = sbr.rel (%p232) target = $region32
        $region31: #{tpu_custom_call.1} parent=27 // pred_region
          %p235 = scmp.lt.s32.totalorder %s24, 1
          %s236 = scalar_select %p235, %s24, 1
          %p237 = scmp.lt.s32.totalorder %s23, 0
          %s238 = scalar_select %p237, %s23, 0
          %s239 = sadd.s32 %s238, %s236
          %s240 = smul.addr %s239, 8
          %s241 = scalar_lea.vmem %s0, %s240
        $region32: #{tpu_custom_call.1} parent=27 // pred_fallthru
          _
        // Predicated region
        $region33: #{tpu_custom_call.1} parent=27 // pred_check
          %p242 = pneg %p78
        $region34: #{tpu_custom_call.1} parent=27 // pred_check_branch
          %244 = sbr.rel (%p242) target = $region36
        $region35: #{tpu_custom_call.1} parent=27 // pred_region
          %p245 = scmp.lt.s32.totalorder %s24, 1
          %s246 = scalar_select %p245, %s24, 1
          %p247 = scmp.lt.s32.totalorder %s23, 0
          %s248 = scalar_select %p247, %s23, 0
          %s249 = sadd.s32 %s248, %s246
          %s250 = smul.addr %s249, 8
          %s251 = scalar_lea.vmem %s1, %s250
        $region36: #{tpu_custom_call.1} parent=27 // pred_fallthru
          _
      $region28: #{tpu_custom_call.1} parent=5 // pred_fallthru
        _
      %p252 = scmp.le.s32.totalorder 1, %s16
      %p253 = scmp.lt.s32.totalorder %s16, 3
      %p254 = pnand %p252, %p253
      %p255 = pneg %p254
      // Predicated region
      $region37: #{tpu_custom_call.1} parent=5 // pred_check
        _
      $region38: #{tpu_custom_call.1} parent=5 // pred_check_branch
        %257 = sbr.rel (%p254) target = $region40
      $region39: #{tpu_custom_call.1} parent=5 // pred_region
        %s258 = ssub.s32 %s16, 1
        // Predicated region
        $region41: #{tpu_custom_call.1} parent=39 // pred_check
          %p259 = pneg %p105
        $region42: #{tpu_custom_call.1} parent=39 // pred_check_branch
          %261 = sbr.rel (%p259) target = $region44
        $region43: #{tpu_custom_call.1} parent=39 // pred_region
          %262 = dma.done [#allocation3], 256
        $region44: #{tpu_custom_call.1} parent=39 // pred_fallthru
          _
        // Predicated region
        $region45: #{tpu_custom_call.1} parent=39 // pred_check
          %p263 = pneg %p152
        $region46: #{tpu_custom_call.1} parent=39 // pred_check_branch
          %265 = sbr.rel (%p263) target = $region48
        $region47: #{tpu_custom_call.1} parent=39 // pred_region
          %266 = dma.done [#allocation6], 2048
        $region48: #{tpu_custom_call.1} parent=39 // pred_fallthru
          _
        %p267 = scmp.lt.s32.totalorder %s26, 1
        %s268 = scalar_select %p267, %s26, 1
        %p269 = scmp.lt.s32.totalorder %s25, 0
        %s270 = scalar_select %p269, %s25, 0
        %s271 = sadd.s32 %s270, %s268
        %s272 = smul.addr %s271, 8
        %s273 = scalar_lea.vmem %s0, %s272
        %p274 = pneg %p56
        %p275 = pneg %p53
        %p276 = scmp.lt.s32.totalorder %s26, 1
        %s277 = scalar_select %p276, %s26, 1
        %p278 = scmp.lt.s32.totalorder %s25, 0
        %s279 = scalar_select %p278, %s25, 0
        %s280 = sadd.s32 %s279, %s277
        %s281 = smul.addr %s280, 8
        %s282 = scalar_lea.vmem %s1, %s281
        %p283 = pneg %p84
        %p284 = pneg %p81
        %p285 = pneg %p105
        %p286 = pneg %p102
        %p287 = scmp.lt.s32.totalorder %s25, 0
        %s288 = scalar_select %p287, %s25, 0
        %s289 = smul.addr %s288, 8
        %s290 = scalar_lea.vmem %s3, %s289
        %p291 = pneg %p131
        %p292 = pneg %p128
        %p293 = pneg %p152
        %p294 = pneg %p149
        %p295 = pneg %p180
        %p296 = pneg %p177
        %s297 = sand.u32 %s167, 1
        %s298 = scalar_lea.sflag [#allocation4], %s297
        %s299 = sand.u32 %s167, 1
        %s300 = smul.addr %s299, 8
        %s301 = scalar_lea.vmem [#allocation7], %s300
        %p302 = scmp.lt.s32.totalorder %s26, 1
        %s303 = scalar_select %p302, %s26, 1
        %p304 = scmp.lt.s32.totalorder %s25, 0
        %s305 = scalar_select %p304, %s25, 0
        %s306 = sadd.s32 %s305, %s303
        %s307 = smul.addr %s306, 8
        %s308 = scalar_lea.vmem %s0, %s307
        %p309 = scmp.lt.s32.totalorder %s26, 1
        %s310 = scalar_select %p309, %s26, 1
        %p311 = scmp.lt.s32.totalorder %s25, 0
        %s312 = scalar_select %p311, %s25, 0
        %s313 = sadd.s32 %s312, %s310
        %s314 = smul.addr %s313, 8
        %s315 = scalar_lea.vmem %s1, %s314
        %p316 = scmp.lt.s32.totalorder %s25, 0
        %s317 = scalar_select %p316, %s25, 0
        %s318 = smul.addr %s317, 8
        %s319 = scalar_lea.vmem %s3, %s318
        %v320 = vld [vmem:[%s308] sm:$0xff]
        %v321 = vld [vmem:[#allocation2] sm:$0xff]
        %v322 = vld [vmem:[#allocation2 + $0x8] sm:$0xf]
        %v323 = vlaneseq
        %v324 = vand.u32 %v323, 127
        %v325 = vld [vmem:[%s315] sm:$0xff]
        %326 = vset.pattern.permute.xlu0 0
        %327 = vperm.xlu0 %326, %v325
        %v328 = vpop.permute.xlu0 %327
        %vm329 = vcmp.eq.s32.totalorder %v328, %v324
        %330 = vset.pattern.permute.xlu0 1
        %331 = vperm.xlu0 %330, %v325
        %v332 = vpop.permute.xlu0 %331
        %vm333 = vcmp.eq.s32.totalorder %v332, %v324
        %vm334 = vmor %vm329, %vm333
        %335 = vset.pattern.permute.xlu0 2
        %336 = vperm.xlu0 %335, %v325
        %v337 = vpop.permute.xlu0 %336
        %vm338 = vcmp.eq.s32.totalorder %v337, %v324
        %vm339 = vmor %vm334, %vm338
        %340 = vset.pattern.permute.xlu0 3
        %341 = vperm.xlu0 %340, %v325
        %v342 = vpop.permute.xlu0 %341
        %vm343 = vcmp.eq.s32.totalorder %v342, %v324
        %vm344 = vmor %vm339, %vm343
        %v345 = vsel %vm344, 1, 0
        %v346 = vcvt.s32.f32 %v345
        %v347 = vld [vmem:[#allocation5] sm:$0xff]
        %v348 = vld [vmem:[#allocation5 + $0x8] sm:$0xff]
        %v349 = vld [vmem:[#allocation5 + $0x10] sm:$0xff]
        %v350 = vld [vmem:[#allocation5 + $0x18] sm:$0xff]
        %v351 = vld [vmem:[#allocation5 + $0x20] sm:$0xff]
        %v352 = vld [vmem:[#allocation5 + $0x28] sm:$0xff]
        %v353 = vld [vmem:[#allocation5 + $0x30] sm:$0xff]
        %v354 = vld [vmem:[#allocation5 + $0x38] sm:$0xff]
        %v355 = vld [vmem:[#allocation5 + $0x40] sm:$0xff]
        %v356 = vld [vmem:[#allocation5 + $0x48] sm:$0xff]
        %v357 = vld [vmem:[#allocation5 + $0x50] sm:$0xff]
        %v358 = vld [vmem:[#allocation5 + $0x58] sm:$0xff]
        %v359 = vld [vmem:[#allocation5 + $0x60] sm:$0xff]
        %v360 = vld [vmem:[#allocation5 + $0x68] sm:$0xff]
        %v361 = vld [vmem:[#allocation5 + $0x70] sm:$0xff]
        %v362 = vld [vmem:[#allocation5 + $0x78] sm:$0xff]
        %363 = vmatprep.subr.mxu0 0.0
        %364 = vmatpush1.msra.mxu0 %v362
        %365 = vmatprep.subr.mxu0 0.0
        %366 = vmatpush1.msra.mxu0 %v361
        %367 = vmatprep.subr.mxu0 0.0
        %368 = vmatpush1.msra.mxu0 %v360
        %369 = vmatprep.subr.mxu0 0.0
        %370 = vmatpush1.msra.mxu0 %v359
        %371 = vmatprep.subr.mxu0 0.0
        %372 = vmatpush1.msra.mxu0 %v358
        %373 = vmatprep.subr.mxu0 0.0
        %374 = vmatpush1.msra.mxu0 %v357
        %375 = vmatprep.subr.mxu0 0.0
        %376 = vmatpush1.msra.mxu0 %v356
        %377 = vmatprep.subr.mxu0 0.0
        %378 = vmatpush1.msra.mxu0 %v355
        %379 = vmatprep.subr.mxu0 0.0
        %380 = vmatpush1.msra.mxu0 %v354
        %381 = vmatprep.subr.mxu0 0.0
        %382 = vmatpush1.msra.mxu0 %v353
        %383 = vmatprep.subr.mxu0 0.0
        %384 = vmatpush1.msra.mxu0 %v352
        %385 = vmatprep.subr.mxu0 0.0
        %386 = vmatpush1.msra.mxu0 %v351
        %387 = vmatprep.subr.mxu0 0.0
        %388 = vmatpush1.msra.mxu0 %v350
        %389 = vmatprep.subr.mxu0 0.0
        %390 = vmatpush1.msra.mxu0 %v349
        %391 = vmatprep.subr.mxu0 0.0
        %392 = vmatpush1.msra.mxu0 %v348
        %393 = vmatprep.subr.mxu0 0.0
        %394 = vmatpush1.msra.mxu0 %v347
        %395 = vmatprep.subr.mxu0 0.0
        %396 = vmatpush2.msra.mxu0 0.0
        %397 = vmatprep.subr.mxu0 0.0
        %398 = vmatpush2.msra.mxu0 0.0
        %399 = vmatprep.subr.mxu0 0.0
        %400 = vmatpush2.msra.mxu0 0.0
        %401 = vmatprep.subr.mxu0 0.0
        %402 = vmatpush2.msra.mxu0 0.0
        %403 = vmatprep.subr.mxu0 0.0
        %404 = vmatpush2.msra.mxu0 0.0
        %405 = vmatprep.subr.mxu0 0.0
        %406 = vmatpush2.msra.mxu0 0.0
        %407 = vmatprep.subr.mxu0 0.0
        %408 = vmatpush2.msra.mxu0 0.0
        %409 = vmatprep.subr.mxu0 0.0
        %410 = vmatpush2.msra.mxu0 0.0
        %411 = vmatprep.subr.mxu0 0.0
        %412 = vmatpush2.msra.mxu0 0.0
        %413 = vmatprep.subr.mxu0 0.0
        %414 = vmatpush2.msra.mxu0 0.0
        %415 = vmatprep.subr.mxu0 0.0
        %416 = vmatpush2.msra.mxu0 0.0
        %417 = vmatprep.subr.mxu0 0.0
        %418 = vmatpush2.msra.mxu0 0.0
        %419 = vmatprep.subr.mxu0 0.0
        %420 = vmatpush2.msra.mxu0 0.0
        %421 = vmatprep.subr.mxu0 0.0
        %422 = vmatpush2.msra.mxu0 0.0
        %423 = vmatprep.subr.mxu0 0.0
        %424 = vmatpush2.msra.mxu0 0.0
        %425 = vmatprep.subr.mxu0 0.0
        %426 = vmatpush2.msra.mxu0 0.0
        %427 = vmatprep.mubr.f32.mxu0 0.0
        %428 = vmatmul.mubr.f32.gmra.mxu0 %v346
        %v429 = vpop.f32.mrf.mxu0
        %v430 = vadd.f32 0.0, %v429
        %v431 = vpop.f32.mrf.mxu0
        %432 = vdwg.mxu0
        %vm433 = vcmask 97280
        %v435 = vsel %vm433, %v320, 0
        %vm437 = vcmask 1043456
        %v439 = vsel %vm437, %v322, 0
        %441 = vmatprep.subr.mxu0 0.0
        %442 = vmatpush1.msra.mxu0 0.0
        %443 = vmatprep.subr.mxu0 0.0
        %444 = vmatpush1.msra.mxu0 0.0
        %445 = vmatprep.subr.mxu0 0.0
        %446 = vmatpush1.msra.mxu0 0.0
        %447 = vmatprep.subr.mxu0 0.0
        %448 = vmatpush1.msra.mxu0 0.0
        %449 = vmatprep.subr.mxu0 0.0
        %450 = vmatpush1.msra.mxu0 0.0
        %451 = vmatprep.subr.mxu0 0.0
        %452 = vmatpush1.msra.mxu0 0.0
        %453 = vmatprep.subr.mxu0 0.0
        %454 = vmatpush1.msra.mxu0 0.0
        %455 = vmatprep.subr.mxu0 0.0
        %456 = vmatpush1.msra.mxu0 0.0
        %457 = vmatprep.subr.mxu0 0.0
        %458 = vmatpush1.msra.mxu0 0.0
        %459 = vmatprep.subr.mxu0 0.0
        %460 = vmatpush1.msra.mxu0 0.0
        %461 = vmatprep.subr.mxu0 0.0
        %462 = vmatpush1.msra.mxu0 0.0
        %463 = vmatprep.subr.mxu0 0.0
        %464 = vmatpush1.msra.mxu0 0.0
        %465 = vmatprep.subr.mxu0 0.0
        %466 = vmatpush1.msra.mxu0 0.0
        %467 = vmatprep.subr.mxu0 0.0
        %468 = vmatpush1.msra.mxu0 0.0
        %469 = vmatprep.subr.mxu0 0.0
        %470 = vmatpush1.msra.mxu0 %v439
        %471 = vmatprep.subr.mxu0 0.0
        %472 = vmatpush1.msra.mxu0 %v321
        %473 = vmatprep.subr.mxu0 0.0
        %474 = vmatpush2.msra.mxu0 0.0
        %475 = vmatprep.subr.mxu0 0.0
        %476 = vmatpush2.msra.mxu0 0.0
        %477 = vmatprep.subr.mxu0 0.0
        %478 = vmatpush2.msra.mxu0 0.0
        %479 = vmatprep.subr.mxu0 0.0
        %480 = vmatpush2.msra.mxu0 0.0
        %481 = vmatprep.subr.mxu0 0.0
        %482 = vmatpush2.msra.mxu0 0.0
        %483 = vmatprep.subr.mxu0 0.0
        %484 = vmatpush2.msra.mxu0 0.0
        %485 = vmatprep.subr.mxu0 0.0
        %486 = vmatpush2.msra.mxu0 0.0
        %487 = vmatprep.subr.mxu0 0.0
        %488 = vmatpush2.msra.mxu0 0.0
        %489 = vmatprep.subr.mxu0 0.0
        %490 = vmatpush2.msra.mxu0 0.0
        %491 = vmatprep.subr.mxu0 0.0
        %492 = vmatpush2.msra.mxu0 0.0
        %493 = vmatprep.subr.mxu0 0.0
        %494 = vmatpush2.msra.mxu0 0.0
        %495 = vmatprep.subr.mxu0 0.0
        %496 = vmatpush2.msra.mxu0 0.0
        %497 = vmatprep.subr.mxu0 0.0
        %498 = vmatpush2.msra.mxu0 0.0
        %499 = vmatprep.subr.mxu0 0.0
        %500 = vmatpush2.msra.mxu0 0.0
        %501 = vmatprep.subr.mxu0 0.0
        %502 = vmatpush2.msra.mxu0 0.0
        %503 = vmatprep.subr.mxu0 0.0
        %504 = vmatpush2.msra.mxu0 0.0
        %505 = vmatprep.mubr.f32.mxu0 0.0
        %506 = vmatmul.mubr.f32.gmra.mxu0 %v435
        %v507 = vpop.f32.mrf.mxu0
        %v508 = vadd.f32 %v430, %v507
        %v509 = vpop.f32.mrf.mxu0
        %510 = vdwg.mxu0
        %v511 = vld [vmem:[%s319] sm:$0xff]
        %v512 = vadd.f32 %v508, %v511
        %513 = vst [vmem:[%s301] sm:$0xff] %v512
        %s514 = sand.u32 %s167, 1
        %s515 = scalar_lea.sflag [#allocation4], %s514
        %s516 = sand.u32 %s167, 1
        %s517 = smul.addr %s516, 8
        %s518 = scalar_lea.vmem [#allocation7], %s517
        // Predicated region
        $region49: #{tpu_custom_call.1} parent=39 // pred_check
          %p519 = pneg %p177
        $region50: #{tpu_custom_call.1} parent=39 // pred_check_branch
          %521 = sbr.rel (%p519) target = $region52
        $region51: #{tpu_custom_call.1} parent=39 // pred_region
          %s523 = ssub.s32 128, 128
          %524 = vsyncadd %s515, %s523
          %s525 = sadd.s32 %s25, %s26
          %s526 = smul.addr %s525, 128
          %s527 = scalar_lea.hbm %s5, %s526
          %s529 = sshll.u32 %s518, 4
          %s530 = int_to_ptr.vmem [resolvable:$true] %s529
          %532 = dma.vmem_to_hbm [thread:$0]  %s530, 128, %s527, %s515
        $region52: #{tpu_custom_call.1} parent=39 // pred_fallthru
          _
      $region40: #{tpu_custom_call.1} parent=5 // pred_fallthru
        _
      %p533 = scmp.le.s32.totalorder 2, %s16
      // Predicated region
      $region53: #{tpu_custom_call.1} parent=5 // pred_check
        %p534 = pneg %p533
      $region54: #{tpu_custom_call.1} parent=5 // pred_check_branch
        %536 = sbr.rel (%p534) target = $region56
      $region55: #{tpu_custom_call.1} parent=5 // pred_region
        %s537 = ssub.s32 %s16, 2
        // Predicated region
        $region57: #{tpu_custom_call.1} parent=55 // pred_check
          %p538 = pneg %p183
        $region58: #{tpu_custom_call.1} parent=55 // pred_check_branch
          %540 = sbr.rel (%p538) target = $region60
        $region59: #{tpu_custom_call.1} parent=55 // pred_region
          %s541 = sand.u32 %s168, 1
          %s542 = scalar_lea.sflag [#allocation4], %s541
          %s543 = sand.u32 %s168, 1
          %s544 = smul.addr %s543, 8
          %s545 = scalar_lea.vmem [#allocation7], %s544
          %546 = dma.done %s542, 128
        $region60: #{tpu_custom_call.1} parent=55 // pred_fallthru
          _
      $region56: #{tpu_custom_call.1} parent=5 // pred_fallthru
        _
    $region6: #{tpu_custom_call.1} parent=1 // loop_footer
      %s20 = sadd.s32 1, %s16
    $region7: #{tpu_custom_call.1} parent=1 // loop_footer_branch
      %15 = sbr.rel target = $region3
    $region8: #{tpu_custom_call.1} parent=1 // loop_exit
      _
    %547 = vsyncpa [#allocation3], 1
    %s548 = scalar_lea.sflag [#allocation3], 1
    %549 = vsyncpa %s548, 1
    %550 = vsyncpa [#allocation6], 1
    %551 = vsyncpa [#allocation4], 1
    %s552 = scalar_lea.sflag [#allocation4], 1
    %553 = vsyncpa %s552, 1

</llo_original>
